<compile_context>
chip_gen: v5e
topology: v5e:2x2
jax: 0.10.0
libtpu: 0.0.40
codegen_flags: <defaults>
</compile_context>

<pallas_src>
import functools

import jax
import jax.numpy as jnp
from jax.experimental import pallas as pl
from jax.experimental.pallas import tpu as pltpu

_LANE = 128
_SUBLANE = 8
_TILE_TARGET = 4 * 1024 * 1024   # ~4 MiB per array per grid step


def _round_up(x, m):
    return ((x + m - 1) // m) * m


# ---------------------------------------------------------------------------
# Kernel bodies
# ---------------------------------------------------------------------------

def _leaky_body(beta, threshold, inp, mem, spk_ref, mem_out_ref):
    memf = mem.astype(jnp.float32)
    inpf = inp.astype(jnp.float32)
    # Heaviside(mem - threshold), strict '>' to match the torch reference.
    is_spike = (memf - threshold) > 0.0
    spk_ref[...] = jnp.where(is_spike, 1.0, 0.0).astype(spk_ref.dtype)
    # Reset term reuses the compare instead of spk * threshold (one fewer vmul).
    reset = jnp.where(is_spike, threshold, 0.0)
    mem_out_ref[...] = (beta * memf + inpf - reset).astype(mem_out_ref.dtype)


def _leaky_kernel_static(beta, threshold, inp_ref, mem_ref, spk_ref, mem_out_ref):
    _leaky_body(beta, threshold, inp_ref[...], mem_ref[...], spk_ref, mem_out_ref)


def _leaky_kernel_dynamic(params_ref, inp_ref, mem_ref, spk_ref, mem_out_ref):
    # params_ref lives in SMEM: [beta, threshold] float32 scalars.
    _leaky_body(params_ref[0], params_ref[1],
                inp_ref[...], mem_ref[...], spk_ref, mem_out_ref)


# ---------------------------------------------------------------------------
# Layout selection (avoid pad/slice copies whenever possible)
# ---------------------------------------------------------------------------

def _choose_layout(shape):
    """Return (R, C, needs_pad) describing a 2-D view of the flattened array."""
    n = 1
    for s in shape:
        n *= int(s)
    # Fast path: lane-aligned flatten -> metadata-only reshape, unmasked stores.
    if n > 0 and n % _LANE == 0:
        for c in (2048, 1024, 512, 256, 128):
            if n % c == 0:
                return n // c, c, False
    # Native-last-dim path: zero data movement; edge stores may be lane-masked
    # but that is far cheaper than an extra pad + slice pass over HBM.
    if len(shape) >= 2 and n > 0:
        c = int(shape[-1])
        if c * 4 <= _TILE_TARGET:   # one row must fit well inside a tile
            return n // c, c, False
    # Fallback (rare: huge unaligned 1-D, scalars): minimal pad to a lane multiple.
    # TODO(synk): could split off only the tail block instead of padding.
    return None, None, True


# ---------------------------------------------------------------------------
# Public wrapper
# ---------------------------------------------------------------------------

def leaky_surrogate(input_, mem, *, beta, threshold=1.0,
                    spike_dtype=None, donate_mem=False,
                    target_tile_bytes=_TILE_TARGET):
    """LeakySurrogate forward as a Pallas TPU kernel.

    input_, mem: arrays of identical shape. Returns (spk, mem_new) with the
    same shape as the inputs; dtype follows the inputs (spike_dtype overrides
    the spike output dtype, e.g. bf16 to save store bandwidth).
    """
    assert input_.shape == mem.shape, "input_ and mem must have the same shape"
    orig_shape = input_.shape
    n = 1
    for s in orig_shape:
        n *= int(s)

    out_dtype = jnp.promote_types(input_.dtype, mem.dtype)
    spk_dtype = jnp.dtype(spike_dtype) if spike_dtype is not None else out_dtype

    R, C, needs_pad = _choose_layout(orig_shape)
    if needs_pad:
        n_pad = _round_up(max(n, 1), _LANE)
        C = next(c for c in (2048, 1024, 512, 256, 128) if n_pad % c == 0)
        R = n_pad // C

    def _as_2d(x):
        if needs_pad:
            flat = x.reshape(-1)
            flat = jnp.pad(flat, (0, R * C - n))
            return flat.reshape(R, C)
        return x.reshape(R, C)   # metadata-only for contiguous arrays

    inp2 = _as_2d(input_)
    mem2 = _as_2d(mem)

    # Tile sizing: ~target_tile_bytes per array per step (floor ~2 MiB comes
    # from cdiv), rows a multiple of 8 sublanes or the full extent.
    row_bytes = C * 4
    total_bytes = R * row_bytes
    steps = max(1, -(-total_bytes // int(target_tile_bytes)))
    block_rows = -(-R // steps)
    if R >= _SUBLANE:
        block_rows = min(R, max(_SUBLANE, _round_up(block_rows, _SUBLANE)))
    else:
        block_rows = R
    grid = (pl.cdiv(R, block_rows),)

    tile_spec = pl.BlockSpec((block_rows, C), lambda i: (i, 0))
    out_shape = (jax.ShapeDtypeStruct((R, C), spk_dtype),
                 jax.ShapeDtypeStruct((R, C), out_dtype))
    out_specs = [tile_spec, tile_spec]

    tile_bytes = block_rows * C * 4
    vmem_bytes = int(min(56 * 1024 * 1024,
                         max(32 * 1024 * 1024, 2 * 4 * tile_bytes + (4 << 20))))
    cparams = pltpu.CompilerParams(
        dimension_semantics=("parallel",),   # lets v7x shard the grid over 2 TCs
        vmem_limit_bytes=vmem_bytes,
    )

    static_params = isinstance(beta, (int, float)) and isinstance(threshold, (int, float))
    if static_params:
        kernel = functools.partial(_leaky_kernel_static, float(beta), float(threshold))
        in_specs = [tile_spec, tile_spec]
        operands = (inp2, mem2)
        mem_in_idx = 1
    else:
        kernel = _leaky_kernel_dynamic
        params = jnp.stack([jnp.asarray(beta, jnp.float32).reshape(()),
                            jnp.asarray(threshold, jnp.float32).reshape(())])
        in_specs = [pl.BlockSpec(memory_space=pltpu.MemorySpace.SMEM),
                    tile_spec, tile_spec]
        operands = (params, inp2, mem2)
        mem_in_idx = 2

    # Alias the membrane input buffer onto mem_new only when the caller donates
    # it (otherwise XLA would insert a defensive copy).
    io_aliases = {mem_in_idx: 1} if (donate_mem and mem.dtype == out_dtype) else {}

    spk2, mem_new2 = pl.pallas_call(
        kernel,
        out_shape=out_shape,
        grid_spec=pltpu.PrefetchScalarGridSpec(
            num_scalar_prefetch=0,
            grid=grid,
            in_specs=in_specs,
            out_specs=out_specs,
        ),
        compiler_params=cparams,
        input_output_aliases=io_aliases,
    )(*operands)

    if needs_pad:
        spk = spk2.reshape(-1)[:n].reshape(orig_shape)
        mem_new = mem_new2.reshape(-1)[:n].reshape(orig_shape)
    else:
        spk = spk2.reshape(orig_shape)
        mem_new = mem_new2.reshape(orig_shape)
    return spk, mem_new


def leaky_surrogate_ref(input_, mem, *, beta, threshold=1.0):
    spk = (mem - threshold > 0.0).astype(input_.dtype)
    mem_new = beta * mem + input_ - spk * threshold
    return spk, mem_new


if __name__ == "__main__":
    key = jax.random.PRNGKey(0)
    k1, k2, k3, k4 = jax.random.split(key, 4)

    beta, threshold = 0.9, 1.0

    # Case 1: hidden dim not a multiple of 128 -> native-last-dim path
    # (no pad, no output slice; single (8, 300) block).
    B, H = 8, 300
    inp1 = jax.random.normal(k1, (B, H), dtype=jnp.float32)
    mem1 = jax.random.normal(k2, (B, H), dtype=jnp.float32) * 2.0
    spk1, new1 = leaky_surrogate(inp1, mem1, beta=beta, threshold=threshold)

    # Case 2: 128-aligned size -> lane-dense slab path (metadata-only reshape);
    # beta/threshold passed as JAX scalars -> SMEM params kernel (no float()).
    B2, H2 = 4, 512
    inp2 = jax.random.normal(k3, (B2, H2), dtype=jnp.float32)
    mem2 = jax.random.normal(k4, (B2, H2), dtype=jnp.float32) * 2.0
    spk2, new2 = leaky_surrogate(inp2, mem2,
                                 beta=jnp.float32(beta),
                                 threshold=jnp.float32(threshold))

    jax.block_until_ready((spk1, new1, spk2, new2))

    rs1, rm1 = leaky_surrogate_ref(inp1, mem1, beta=beta, threshold=threshold)
    rs2, rm2 = leaky_surrogate_ref(inp2, mem2, beta=beta, threshold=threshold)

    assert spk1.shape == (B, H) and new1.shape == (B, H)
    assert spk1.dtype == inp1.dtype and new1.dtype == inp1.dtype
    assert jnp.array_equal(spk1, rs1), "spike mismatch (case 1)"
    assert jnp.allclose(new1, rm1, atol=1e-6), "membrane mismatch (case 1)"
    assert jnp.array_equal(spk2, rs2), "spike mismatch (case 2)"
    assert jnp.allclose(new2, rm2, atol=1e-6), "membrane mismatch (case 2)"

    print("KERNEL_OK")
</pallas_src>

<mosaic_0001>
module attributes {stable_mosaic.version = 11 : i64} {
  func.func @_leaky_kernel_static(%arg0: i32, %arg1: memref<8x300xf32, #tpu.memory_space<vmem>>, %arg2: memref<8x300xf32, #tpu.memory_space<vmem>>, %arg3: memref<8x300xf32, #tpu.memory_space<vmem>>, %arg4: memref<8x300xf32, #tpu.memory_space<vmem>>) attributes {dimension_semantics = [#tpu.dimension_semantics<parallel>], iteration_bounds = array<i64: 1>, scalar_prefetch = 0 : i64, scratch_operands = 0 : i64, tpu.core_type = #tpu.core_type<tc>, window_params = [{transform_indices = @transform_0, window_bounds = array<i64: 8, 300>}, {transform_indices = @transform_1, window_bounds = array<i64: 8, 300>}, {transform_indices = @transform_2, window_bounds = array<i64: 8, 300>}, {transform_indices = @transform_3, window_bounds = array<i64: 8, 300>}]} {
    %c0 = arith.constant 0 : index
    %c0_0 = arith.constant 0 : index
    %0 = vector.load %arg1[%c0, %c0_0] : memref<8x300xf32, #tpu.memory_space<vmem>>, vector<8x300xf32>
    %c0_1 = arith.constant 0 : index
    %c0_2 = arith.constant 0 : index
    %1 = vector.load %arg2[%c0_1, %c0_2] : memref<8x300xf32, #tpu.memory_space<vmem>>, vector<8x300xf32>
    %cst = arith.constant 1.000000e+00 : f32
    %2 = vector.broadcast %cst : f32 to vector<8x300xf32>
    %3 = arith.subf %1, %2 : vector<8x300xf32>
    %cst_3 = arith.constant 0.000000e+00 : f32
    %4 = vector.broadcast %cst_3 : f32 to vector<8x300xf32>
    %5 = arith.cmpf ogt, %3, %4 : vector<8x300xf32>
    %cst_4 = arith.constant 1.000000e+00 : f32
    %cst_5 = arith.constant 0.000000e+00 : f32
    %6 = vector.broadcast %cst_4 : f32 to vector<8x300xf32>
    %7 = vector.broadcast %cst_5 : f32 to vector<8x300xf32>
    %8 = arith.select %5, %6, %7 : vector<8x300xi1>, vector<8x300xf32>
    %c0_6 = arith.constant 0 : index
    %c0_7 = arith.constant 0 : index
    %9 = vector.load %arg3[%c0_6, %c0_7] : memref<8x300xf32, #tpu.memory_space<vmem>>, vector<8x300xf32>
    tpu.vector_store %arg3[%c0_6, %c0_7], %8 {strides = array<i32>} : memref<8x300xf32, #tpu.memory_space<vmem>>, vector<8x300xf32>,
    %cst_8 = arith.constant 1.000000e+00 : f32
    %cst_9 = arith.constant 0.000000e+00 : f32
    %10 = vector.broadcast %cst_8 : f32 to vector<8x300xf32>
    %11 = vector.broadcast %cst_9 : f32 to vector<8x300xf32>
    %12 = arith.select %5, %10, %11 : vector<8x300xi1>, vector<8x300xf32>
    %cst_10 = arith.constant 0.899999976 : f32
    %13 = vector.broadcast %cst_10 : f32 to vector<8x300xf32>
    %14 = arith.mulf %13, %1 : vector<8x300xf32>
    %15 = arith.addf %14, %0 : vector<8x300xf32>
    %16 = arith.subf %15, %12 : vector<8x300xf32>
    %c0_11 = arith.constant 0 : index
    %c0_12 = arith.constant 0 : index
    %17 = vector.load %arg4[%c0_11, %c0_12] : memref<8x300xf32, #tpu.memory_space<vmem>>, vector<8x300xf32>
    tpu.vector_store %arg4[%c0_11, %c0_12], %16 {strides = array<i32>} : memref<8x300xf32, #tpu.memory_space<vmem>>, vector<8x300xf32>,
    return
  }
  func.func @transform_0(%arg0: i32) -> (i32, i32) {
    %c0_i32 = arith.constant 0 : i32
    %c0_i32_0 = arith.constant 0 : i32
    return %arg0, %c0_i32 : i32, i32
  }
  func.func @transform_1(%arg0: i32) -> (i32, i32) {
    %c0_i32 = arith.constant 0 : i32
    %c0_i32_0 = arith.constant 0 : i32
    return %arg0, %c0_i32 : i32, i32
  }
  func.func @transform_2(%arg0: i32) -> (i32, i32) {
    %c0_i32 = arith.constant 0 : i32
    %c0_i32_0 = arith.constant 0 : i32
    return %arg0, %c0_i32 : i32, i32
  }
  func.func @transform_3(%arg0: i32) -> (i32, i32) {
    %c0_i32 = arith.constant 0 : i32
    %c0_i32_0 = arith.constant 0 : i32
    return %arg0, %c0_i32 : i32, i32
  }
}

</mosaic_0001>

<llo_original>
// kernel: tpu_custom_call.1
$region0: #{tpu_custom_call.1}
  #allocation0 [shape = 'u32[]', space=smem, size = 0x4, offset = 0x4, fixed_abs, tag = 'smem constant byte address 0x4 - core index']
  #allocation1 [shape = 'u32[72,128]{1,0:T(1,128)}', space=vmem, size = 0x9000, scoped, tag = 'internal scratch']
  %s0 = inlined_call_operand.hbm [shape: f32[8,300], index: 0, kind: input, shape index: {}]
  %s1 = inlined_call_operand.hbm [shape: f32[8,300], index: 1, kind: input, shape index: {}]
  %s2 = inlined_call_operand.hbm [shape: f32[8,300], index: 2, kind: output, shape index: {0}]
  %s3 = inlined_call_operand.hbm [shape: f32[8,300], index: 3, kind: output, shape index: {1}]
  %4 = xla_tuple %s2, %s3
  %s5 = sld [smem:[#allocation0]]
  $region34: #{tpu_custom_call.1} parent=0
    _
  %s7 = ssub.s32 1, %s5
  %s8 = scalar_select 0, %s7, %s5
  $region1: #{tpu_custom_call.1} parent=0
    #allocation2 [shape = 'u8[12288]{0}', space=vmem, size = 0x3000, scoped, tag = 'input window, operand 0, single buffered']
    #allocation3 [shape = 's32[1]{0}', space=sflag, size = 0x4, scoped, tag = 'scoped memory for tpu_custom_call.1']
    #allocation4 [shape = 's32[1]{0}', space=sflag, size = 0x4, scoped, tag = 'scoped memory for tpu_custom_call.1']
    #allocation5 [shape = 'u8[12288]{0}', space=vmem, size = 0x3000, scoped, tag = 'input window, operand 1, single buffered']
    #allocation6 [shape = 's32[1]{0}', space=sflag, size = 0x4, scoped, tag = 'scoped memory for tpu_custom_call.1']
    #allocation7 [shape = 'u8[12288]{0}', space=vmem, size = 0x3000, scoped, tag = 'output window, operand 0, single buffered']
    #allocation8 [shape = 'u8[12288]{0}', space=vmem, size = 0x3000, scoped, tag = 'output window, operand 1, single buffered']
    #allocation9 [shape = 's32[1]{0}', space=sflag, size = 0x4, scoped, tag = 'scoped memory for tpu_custom_call.1']
    %9 = vsyncpa [#allocation3], 0
    %10 = vsyncpa [#allocation6], 0
    %11 = vsyncpa [#allocation4], 0
    %12 = vsyncpa [#allocation9], 0
    // Predicated region
    $region2: #{tpu_custom_call.1} parent=1 // pred_check
      _
    $region3: #{tpu_custom_call.1} parent=1 // pred_check_branch
      %14 = sbr.rel (0) target = $region5
    $region4: #{tpu_custom_call.1} parent=1 // pred_region
      %16 = vsyncadd [#allocation3], 0
      %s18 = sshll.u32 %s0, 4
      %s19 = int_to_ptr.hbm [resolvable:$true] %s18
      %s20 = sshll.u32 [#allocation2], 4
      %s21 = int_to_ptr.vmem [resolvable:$true] %s20
      %23 = dma.hbm_to_vmem [thread:$0]  %s19, 384, %s21, [#allocation3]
    $region5: #{tpu_custom_call.1} parent=1 // pred_fallthru
      _
    // Predicated region
    $region6: #{tpu_custom_call.1} parent=1 // pred_check
      _
    $region7: #{tpu_custom_call.1} parent=1 // pred_check_branch
      %25 = sbr.rel (0) target = $region9
    $region8: #{tpu_custom_call.1} parent=1 // pred_region
      %27 = vsyncadd [#allocation6], 0
      %s29 = sshll.u32 %s1, 4
      %s30 = int_to_ptr.hbm [resolvable:$true] %s29
      %s31 = sshll.u32 [#allocation5], 4
      %s32 = int_to_ptr.vmem [resolvable:$true] %s31
      %34 = dma.hbm_to_vmem [thread:$0]  %s30, 384, %s32, [#allocation6]
    $region9: #{tpu_custom_call.1} parent=1 // pred_fallthru
      _
    // Predicated region
    $region10: #{tpu_custom_call.1} parent=1 // pred_check
      _
    $region11: #{tpu_custom_call.1} parent=1 // pred_check_branch
      %36 = sbr.rel (0) target = $region13
    $region12: #{tpu_custom_call.1} parent=1 // pred_region
      %38 = dma.done [#allocation3], 384
    $region13: #{tpu_custom_call.1} parent=1 // pred_fallthru
      _
    // Predicated region
    $region14: #{tpu_custom_call.1} parent=1 // pred_check
      _
    $region15: #{tpu_custom_call.1} parent=1 // pred_check_branch
      %40 = sbr.rel (0) target = $region17
    $region16: #{tpu_custom_call.1} parent=1 // pred_region
      %42 = dma.done [#allocation6], 384
    $region17: #{tpu_custom_call.1} parent=1 // pred_fallthru
      _
    %v43 = vld [vmem:[#allocation2] sm:$0xff]
    %v44 = vld [vmem:[#allocation2 + $0x8] sm:$0xff]
    %v45 = vld [vmem:[#allocation2 + $0x10] sm:$0xff]
    %v46 = vld [vmem:[#allocation5] sm:$0xff]
    %v47 = vld [vmem:[#allocation5 + $0x8] sm:$0xff]
    %v48 = vld [vmem:[#allocation5 + $0x10] sm:$0xff]
    %v49 = vsub.f32 %v46, 1.0
    %v50 = vsub.f32 %v47, 1.0
    %v51 = vsub.f32 %v48, 1.0
    %vm52 = vcmp.gt.f32.partialorder %v49, 0.0
    %vm53 = vcmp.gt.f32.partialorder %v50, 0.0
    %vm54 = vcmp.gt.f32.partialorder %v51, 0.0
    %v55 = vsel %vm52, 1.0, 0.0
    %v56 = vsel %vm53, 1.0, 0.0
    %v57 = vsel %vm54, 1.0, 0.0
    %58 = vst [vmem:[#allocation7] sm:$0xff] %v55
    %59 = vst [vmem:[#allocation7 + $0x8] sm:$0xff] %v56
    %vm60 = vcmask 359424
    %61 = vst.msk [vmem:[#allocation7 + $0x10] sm:$0xff] %vm60, %v57
    %v62 = vmul.f32 %v46, 0.9
    %v63 = vmul.f32 %v47, 0.9
    %v64 = vmul.f32 %v48, 0.9
    %v65 = vadd.f32 %v62, %v43
    %v66 = vadd.f32 %v63, %v44
    %v67 = vadd.f32 %v64, %v45
    %v68 = vsub.f32 %v65, %v55
    %v69 = vsub.f32 %v66, %v56
    %v70 = vsub.f32 %v67, %v57
    %71 = vst [vmem:[#allocation8] sm:$0xff] %v68
    %72 = vst [vmem:[#allocation8 + $0x8] sm:$0xff] %v69
    %73 = vst.msk [vmem:[#allocation8 + $0x10] sm:$0xff] %vm60, %v70
    // Predicated region
    $region18: #{tpu_custom_call.1} parent=1 // pred_check
      _
    $region19: #{tpu_custom_call.1} parent=1 // pred_check_branch
      %75 = sbr.rel (0) target = $region21
    $region20: #{tpu_custom_call.1} parent=1 // pred_region
      %77 = vsyncadd [#allocation4], 0
      %s79 = sshll.u32 [#allocation7], 4
      %s80 = int_to_ptr.vmem [resolvable:$true] %s79
      %s81 = sshll.u32 %s2, 4
      %s82 = int_to_ptr.hbm [resolvable:$true] %s81
      %84 = dma.vmem_to_hbm [thread:$0]  %s80, 384, %s82, [#allocation4]
    $region21: #{tpu_custom_call.1} parent=1 // pred_fallthru
      _
    // Predicated region
    $region22: #{tpu_custom_call.1} parent=1 // pred_check
      _
    $region23: #{tpu_custom_call.1} parent=1 // pred_check_branch
      %86 = sbr.rel (0) target = $region25
    $region24: #{tpu_custom_call.1} parent=1 // pred_region
      %88 = vsyncadd [#allocation9], 0
      %s90 = sshll.u32 [#allocation8], 4
      %s91 = int_to_ptr.vmem [resolvable:$true] %s90
      %s92 = sshll.u32 %s3, 4
      %s93 = int_to_ptr.hbm [resolvable:$true] %s92
      %95 = dma.vmem_to_hbm [thread:$0]  %s91, 384, %s93, [#allocation9]
    $region25: #{tpu_custom_call.1} parent=1 // pred_fallthru
      _
    // Predicated region
    $region26: #{tpu_custom_call.1} parent=1 // pred_check
      _
    $region27: #{tpu_custom_call.1} parent=1 // pred_check_branch
      %97 = sbr.rel (0) target = $region29
    $region28: #{tpu_custom_call.1} parent=1 // pred_region
      %99 = dma.done [#allocation4], 384
    $region29: #{tpu_custom_call.1} parent=1 // pred_fallthru
      _
    // Predicated region
    $region30: #{tpu_custom_call.1} parent=1 // pred_check
      _
    $region31: #{tpu_custom_call.1} parent=1 // pred_check_branch
      %101 = sbr.rel (0) target = $region33
    $region32: #{tpu_custom_call.1} parent=1 // pred_region
      %103 = dma.done [#allocation9], 384
    $region33: #{tpu_custom_call.1} parent=1 // pred_fallthru
      _
    %104 = vsyncpa [#allocation3], 1
    %105 = vsyncpa [#allocation6], 1
    %106 = vsyncpa [#allocation4], 1
    %107 = vsyncpa [#allocation9], 1

</llo_original>
